<compile_context>
chip_gen: v7x
topology: tpu7x:2x2x1
jax: 0.10.0
libtpu: 0.0.40
codegen_flags: <defaults>
</compile_context>

<pallas_src>
import functools

import jax
import jax.numpy as jnp
import numpy as np
from jax.experimental import pallas as pl
from jax.experimental.pallas import tpu as pltpu

NEG_SLOPE = 0.2  # LeakyReLU negative_slope
_LANE = 128


def _cdiv(a, b):
    return -(-a // b)


def _leaky_relu(x):
    return jnp.where(x >= 0, x, NEG_SLOPE * x)


def _spectral_mlp_kernel(x_ref, w1_ref, b1_ref, w2_ref, b2_ref, w3_ref, b3_ref,
                         o_ref, *, matmul_dtype):
    # x_ref : (C, TN) f32 tile of frequency-domain activations; columns are
    #         flattened (batch, {real,imag}, H, Wf) positions (lanes).
    # w1    : (C/2, C), w2: (C/2, C/2), w3: (C, C/2)    1x1-conv weights
    # b1,b2 : (C/2, TN), b3: (C, TN)   biases pre-broadcast to lane width
    # o_ref : (C, TN)   x + conv3(lrelu(conv2(lrelu(conv1(x)))))
    x = x_ref[...]
    h = jnp.dot(w1_ref[...], x.astype(matmul_dtype),
                preferred_element_type=jnp.float32) + b1_ref[...]
    h = _leaky_relu(h)
    h = jnp.dot(w2_ref[...], h.astype(matmul_dtype),
                preferred_element_type=jnp.float32) + b2_ref[...]
    h = _leaky_relu(h)
    y = jnp.dot(w3_ref[...], h.astype(matmul_dtype),
                preferred_element_type=jnp.float32) + b3_ref[...]
    o_ref[...] = (x + y).astype(o_ref.dtype)


def _tile_plan(n, max_tile):
    """Pick a lane-aligned tile width and padded N.

    The kernel is memory/overhead-bound, so tiles should be as wide as
    possible; but when the whole slab fits in one max_tile we still split it
    into two tiles so the "parallel" grid axis can shard across v7x's two
    TensorCores (harmless on single-TC v5e/v6e).
    """
    n_lanes = _cdiv(n, _LANE) * _LANE
    if n_lanes <= max_tile:
        n_blocks = n_lanes // _LANE
        if n_blocks >= 2:
            tile = _cdiv(n_blocks, 2) * _LANE
            return tile, 2 * tile
        return n_lanes, n_lanes
    return max_tile, _cdiv(n, max_tile) * max_tile


def attention_forward(x, w1, b1, w2, b2, w3, b3, *,
                      max_tile_n=1024, matmul_dtype=jnp.float32):
    """x: (B, C, H, W) f32; w1:(C/2,C) b1:(C/2,); w2:(C/2,C/2) b2:(C/2,);
    w3:(C,C/2) b3:(C,). Returns (B, C, H, W)."""
    B, C, H, W = x.shape
    Ch = w1.shape[0]  # C // 2

    # FFT in XLA (no Pallas primitive).
    ffted = jnp.fft.rfft2(x, norm="ortho")                        # (B,C,H,Wf) c64
    Wf = ffted.shape[-1]

    # Real & imag share the conv weights -> fuse them onto one lane axis:
    # (C, N) with N = B * 2 * H * Wf.
    z = jnp.stack([jnp.real(ffted), jnp.imag(ffted)], axis=1)     # (B,2,C,H,Wf)
    zt = jnp.transpose(z, (2, 0, 1, 3, 4)).reshape(C, -1)         # (C, N)
    n = zt.shape[1]
    tile_n, n_pad = _tile_plan(n, max_tile_n)
    zt = jnp.pad(zt, ((0, 0), (0, n_pad - n)))

    w1c = w1.astype(matmul_dtype)
    w2c = w2.astype(matmul_dtype)
    w3c = w3.astype(matmul_dtype)
    # Pre-broadcast biases to full tile width -> in-kernel bias add is a pure
    # full-lane VPU op (no lane broadcast per tile). Kept in f32.
    b1c = jnp.broadcast_to(b1.astype(jnp.float32)[:, None], (Ch, tile_n))
    b2c = jnp.broadcast_to(b2.astype(jnp.float32)[:, None], (Ch, tile_n))
    b3c = jnp.broadcast_to(b3.astype(jnp.float32)[:, None], (C, tile_n))

    kernel = functools.partial(_spectral_mlp_kernel, matmul_dtype=matmul_dtype)

    out = pl.pallas_call(
        kernel,
        out_shape=jax.ShapeDtypeStruct((C, n_pad), jnp.float32),
        grid_spec=pltpu.PrefetchScalarGridSpec(
            num_scalar_prefetch=0,
            grid=(n_pad // tile_n,),
            in_specs=[
                pl.BlockSpec((C, tile_n), lambda i: (0, i)),
                pl.BlockSpec((Ch, C), lambda i: (0, 0)),
                pl.BlockSpec((Ch, tile_n), lambda i: (0, 0)),
                pl.BlockSpec((Ch, Ch), lambda i: (0, 0)),
                pl.BlockSpec((Ch, tile_n), lambda i: (0, 0)),
                pl.BlockSpec((C, Ch), lambda i: (0, 0)),
                pl.BlockSpec((C, tile_n), lambda i: (0, 0)),
            ],
            out_specs=pl.BlockSpec((C, tile_n), lambda i: (0, i)),
        ),
        compiler_params=pltpu.CompilerParams(
            dimension_semantics=("parallel",)),
        # Reuse the padded frequency slab's HBM buffer for the output.
        input_output_aliases={0: 0},
    )(zt, w1c, b1c, w2c, b2c, w3c, b3c)

    # Drop padded lane columns BEFORE the inverse FFT (they carry bias-driven
    # junk values by construction).
    out = out[:, :n].reshape(C, B, 2, H, Wf)
    out = jnp.transpose(out, (1, 2, 0, 3, 4))                     # (B,2,C,H,Wf)
    ffted_new = jax.lax.complex(out[:, 0], out[:, 1])
    spatial = jnp.fft.irfft2(ffted_new, s=(H, W), norm="ortho")   # (B,C,H,W)
    return x * spatial


def reference(x, w1, b1, w2, b2, w3, b3):
    """Pure-JAX f32 reference mirroring the PyTorch forward."""
    hp = jax.lax.Precision.HIGHEST
    ffted = jnp.fft.rfft2(x, norm="ortho")

    def branch(t):  # t: (B, C, H, Wf)
        h = jnp.einsum("bchw,oc->bohw", t, w1, precision=hp) + b1[None, :, None, None]
        h = jnp.where(h >= 0, h, NEG_SLOPE * h)
        h = jnp.einsum("bchw,oc->bohw", h, w2, precision=hp) + b2[None, :, None, None]
        h = jnp.where(h >= 0, h, NEG_SLOPE * h)
        h = jnp.einsum("bchw,oc->bohw", h, w3, precision=hp) + b3[None, :, None, None]
        return t + h

    re = branch(jnp.real(ffted))
    im = branch(jnp.imag(ffted))
    spatial = jnp.fft.irfft2(jax.lax.complex(re, im), s=x.shape[-2:], norm="ortho")
    return x * spatial


if __name__ == "__main__":
    B, C, H, W = 2, 32, 16, 16           # embed_dim = 32
    Ch = C // 2

    key = jax.random.PRNGKey(0)
    kx, k1, kb1, k2, kb2, k3, kb3 = jax.random.split(key, 7)

    x = jax.random.normal(kx, (B, C, H, W), dtype=jnp.float32)
    # 1x1 Conv2d weights with the trailing 1x1 spatial dims squeezed: (out, in).
    w1 = jax.random.normal(k1, (Ch, C), dtype=jnp.float32) * 0.2
    b1 = jax.random.normal(kb1, (Ch,), dtype=jnp.float32) * 0.1
    w2 = jax.random.normal(k2, (Ch, Ch), dtype=jnp.float32) * 0.25
    b2 = jax.random.normal(kb2, (Ch,), dtype=jnp.float32) * 0.1
    w3 = jax.random.normal(k3, (C, Ch), dtype=jnp.float32) * 0.25
    b3 = jax.random.normal(kb3, (C,), dtype=jnp.float32) * 0.1

    fwd = jax.jit(attention_forward)     # keep wrapper plumbing fused in XLA
    out = jax.block_until_ready(fwd(x, w1, b1, w2, b2, w3, b3))
    ref = jax.block_until_ready(reference(x, w1, b1, w2, b2, w3, b3))

    assert out.shape == (B, C, H, W), out.shape
    np.testing.assert_allclose(np.asarray(out), np.asarray(ref),
                               rtol=1e-3, atol=1e-3)
    print("KERNEL_OK")
</pallas_src>

<mosaic_0001>
module attributes {stable_mosaic.version = 11 : i64} {
  func.func @_spectral_mlp_kernel(%arg0: i32, %arg1: memref<32x384xf32, #tpu.memory_space<vmem>>, %arg2: memref<16x32xf32, #tpu.memory_space<vmem>>, %arg3: memref<16x384xf32, #tpu.memory_space<vmem>>, %arg4: memref<16x16xf32, #tpu.memory_space<vmem>>, %arg5: memref<16x384xf32, #tpu.memory_space<vmem>>, %arg6: memref<32x16xf32, #tpu.memory_space<vmem>>, %arg7: memref<32x384xf32, #tpu.memory_space<vmem>>, %arg8: memref<32x384xf32, #tpu.memory_space<vmem>>) attributes {dimension_semantics = [#tpu.dimension_semantics<parallel>], iteration_bounds = array<i64: 2>, scalar_prefetch = 0 : i64, scratch_operands = 0 : i64, tpu.core_type = #tpu.core_type<tc>, window_params = [{transform_indices = @transform_0, window_bounds = array<i64: 32, 384>}, {pipeline_mode = #tpu.pipeline_mode<synchronous>, transform_indices = @transform_1, window_bounds = array<i64: 16, 32>}, {pipeline_mode = #tpu.pipeline_mode<synchronous>, transform_indices = @transform_2, window_bounds = array<i64: 16, 384>}, {pipeline_mode = #tpu.pipeline_mode<synchronous>, transform_indices = @transform_3, window_bounds = array<i64: 16, 16>}, {pipeline_mode = #tpu.pipeline_mode<synchronous>, transform_indices = @transform_4, window_bounds = array<i64: 16, 384>}, {pipeline_mode = #tpu.pipeline_mode<synchronous>, transform_indices = @transform_5, window_bounds = array<i64: 32, 16>}, {pipeline_mode = #tpu.pipeline_mode<synchronous>, transform_indices = @transform_6, window_bounds = array<i64: 32, 384>}, {transform_indices = @transform_7, window_bounds = array<i64: 32, 384>}]} {
    %c0 = arith.constant 0 : index
    %c0_0 = arith.constant 0 : index
    %0 = vector.load %arg1[%c0, %c0_0] : memref<32x384xf32, #tpu.memory_space<vmem>>, vector<32x384xf32>
    %c0_1 = arith.constant 0 : index
    %c0_2 = arith.constant 0 : index
    %1 = vector.load %arg2[%c0_1, %c0_2] : memref<16x32xf32, #tpu.memory_space<vmem>>, vector<16x32xf32>
    %cst = arith.constant dense<0.000000e+00> : vector<16x384xf32>
    %2 = tpu.matmul %1, %0, %cst {dimension_numbers = #tpu.dot_dimension_numbers<[1], [0], [0], [1], [0, 0, 1, 1], [], []>} : vector<16x32xf32>, vector<32x384xf32>, vector<16x384xf32> -> vector<16x384xf32>
    %c0_3 = arith.constant 0 : index
    %c0_4 = arith.constant 0 : index
    %3 = vector.load %arg3[%c0_3, %c0_4] : memref<16x384xf32, #tpu.memory_space<vmem>>, vector<16x384xf32>
    %4 = arith.addf %2, %3 : vector<16x384xf32>
    %cst_5 = arith.constant 0.000000e+00 : f32
    %5 = vector.broadcast %cst_5 : f32 to vector<16x384xf32>
    %6 = arith.cmpf oge, %4, %5 : vector<16x384xf32>
    %cst_6 = arith.constant 2.000000e-01 : f32
    %7 = vector.broadcast %cst_6 : f32 to vector<16x384xf32>
    %8 = arith.mulf %7, %4 : vector<16x384xf32>
    %9 = arith.select %6, %4, %8 : vector<16x384xi1>, vector<16x384xf32>
    %c0_7 = arith.constant 0 : index
    %c0_8 = arith.constant 0 : index
    %10 = vector.load %arg4[%c0_7, %c0_8] : memref<16x16xf32, #tpu.memory_space<vmem>>, vector<16x16xf32>
    %cst_9 = arith.constant dense<0.000000e+00> : vector<16x384xf32>
    %11 = tpu.matmul %10, %9, %cst_9 {dimension_numbers = #tpu.dot_dimension_numbers<[1], [0], [0], [1], [0, 0, 1, 1], [], []>} : vector<16x16xf32>, vector<16x384xf32>, vector<16x384xf32> -> vector<16x384xf32>
    %c0_10 = arith.constant 0 : index
    %c0_11 = arith.constant 0 : index
    %12 = vector.load %arg5[%c0_10, %c0_11] : memref<16x384xf32, #tpu.memory_space<vmem>>, vector<16x384xf32>
    %13 = arith.addf %11, %12 : vector<16x384xf32>
    %cst_12 = arith.constant 0.000000e+00 : f32
    %14 = vector.broadcast %cst_12 : f32 to vector<16x384xf32>
    %15 = arith.cmpf oge, %13, %14 : vector<16x384xf32>
    %cst_13 = arith.constant 2.000000e-01 : f32
    %16 = vector.broadcast %cst_13 : f32 to vector<16x384xf32>
    %17 = arith.mulf %16, %13 : vector<16x384xf32>
    %18 = arith.select %15, %13, %17 : vector<16x384xi1>, vector<16x384xf32>
    %c0_14 = arith.constant 0 : index
    %c0_15 = arith.constant 0 : index
    %19 = vector.load %arg6[%c0_14, %c0_15] : memref<32x16xf32, #tpu.memory_space<vmem>>, vector<32x16xf32>
    %cst_16 = arith.constant dense<0.000000e+00> : vector<32x384xf32>
    %20 = tpu.matmul %19, %18, %cst_16 {dimension_numbers = #tpu.dot_dimension_numbers<[1], [0], [0], [1], [0, 0, 1, 1], [], []>} : vector<32x16xf32>, vector<16x384xf32>, vector<32x384xf32> -> vector<32x384xf32>
    %c0_17 = arith.constant 0 : index
    %c0_18 = arith.constant 0 : index
    %21 = vector.load %arg7[%c0_17, %c0_18] : memref<32x384xf32, #tpu.memory_space<vmem>>, vector<32x384xf32>
    %22 = arith.addf %20, %21 : vector<32x384xf32>
    %23 = arith.addf %0, %22 : vector<32x384xf32>
    %c0_19 = arith.constant 0 : index
    %c0_20 = arith.constant 0 : index
    %24 = vector.load %arg8[%c0_19, %c0_20] : memref<32x384xf32, #tpu.memory_space<vmem>>, vector<32x384xf32>
    tpu.vector_store %arg8[%c0_19, %c0_20], %23 {strides = array<i32>} : memref<32x384xf32, #tpu.memory_space<vmem>>, vector<32x384xf32>,
    return
  }
  func.func @transform_0(%arg0: i32) -> (i32, i32) {
    %c0_i32 = arith.constant 0 : i32
    %c0_i32_0 = arith.constant 0 : i32
    return %c0_i32, %arg0 : i32, i32
  }
  func.func @transform_1(%arg0: i32) -> (i32, i32) {
    %c0_i32 = arith.constant 0 : i32
    %c0_i32_0 = arith.constant 0 : i32
    %c0_i32_1 = arith.constant 0 : i32
    return %c0_i32, %c0_i32_0 : i32, i32
  }
  func.func @transform_2(%arg0: i32) -> (i32, i32) {
    %c0_i32 = arith.constant 0 : i32
    %c0_i32_0 = arith.constant 0 : i32
    %c0_i32_1 = arith.constant 0 : i32
    return %c0_i32, %c0_i32_0 : i32, i32
  }
  func.func @transform_3(%arg0: i32) -> (i32, i32) {
    %c0_i32 = arith.constant 0 : i32
    %c0_i32_0 = arith.constant 0 : i32
    %c0_i32_1 = arith.constant 0 : i32
    return %c0_i32, %c0_i32_0 : i32, i32
  }
  func.func @transform_4(%arg0: i32) -> (i32, i32) {
    %c0_i32 = arith.constant 0 : i32
    %c0_i32_0 = arith.constant 0 : i32
    %c0_i32_1 = arith.constant 0 : i32
    return %c0_i32, %c0_i32_0 : i32, i32
  }
  func.func @transform_5(%arg0: i32) -> (i32, i32) {
    %c0_i32 = arith.constant 0 : i32
    %c0_i32_0 = arith.constant 0 : i32
    %c0_i32_1 = arith.constant 0 : i32
    return %c0_i32, %c0_i32_0 : i32, i32
  }
  func.func @transform_6(%arg0: i32) -> (i32, i32) {
    %c0_i32 = arith.constant 0 : i32
    %c0_i32_0 = arith.constant 0 : i32
    %c0_i32_1 = arith.constant 0 : i32
    return %c0_i32, %c0_i32_0 : i32, i32
  }
  func.func @transform_7(%arg0: i32) -> (i32, i32) {
    %c0_i32 = arith.constant 0 : i32
    %c0_i32_0 = arith.constant 0 : i32
    return %c0_i32, %arg0 : i32, i32
  }
}

</mosaic_0001>

<llo_original>
// kernel: attention_forward.1
$region0: #{attention_forward.1}
  #allocation0 [shape = 'u32[]', space=smem, size = 0x4, offset = 0x4, fixed_abs, tag = 'smem constant byte address 0x4 - core index']
  #allocation1 [shape = 'u32[144,128]{1,0:T(1,128)}', space=vmem, size = 0x12000, scoped, tag = 'internal scratch']
  %s0 = inlined_call_operand.vmem [shape: f32[32,768], index: 0, kind: input, shape index: {}, may-alias: {0,7}]
  %s1 = inlined_call_operand.vmem [shape: f32[16,32], index: 1, kind: input, shape index: {}]
  %s2 = inlined_call_operand.vmem [shape: f32[16,384], index: 2, kind: input, shape index: {}]
  %s3 = inlined_call_operand.vmem [shape: f32[16,16], index: 3, kind: input, shape index: {}]
  %s4 = inlined_call_operand.vmem [shape: f32[16,384], index: 4, kind: input, shape index: {}]
  %s5 = inlined_call_operand.vmem [shape: f32[32,16], index: 5, kind: input, shape index: {}]
  %s6 = inlined_call_operand.vmem [shape: f32[32,384], index: 6, kind: input, shape index: {}]
  %s7 = inlined_call_operand.vmem [shape: f32[32,768], index: 7, kind: output, shape index: {}, may-alias: {0,7}]
  %s8 = sld [smem:[#allocation0]]
  $region103: #{attention_forward.1} parent=0
    _
  %s10 = ssub.s32 1, %s8
  %s11 = scalar_select 0, %s10, %s8
  $region1: #{attention_forward.1} parent=0
    #allocation2 [shape = 'u8[98304]{0}', space=vmem, size = 0x18000, scoped, tag = 'input window, operand 0']
    #allocation3 [shape = 'u8[98304]{0}', space=vmem, size = 0x18000, scoped, tag = 'output window, operand 0']
    loop: start=0, step=1, limit=4
    $region2: #{attention_forward.1} parent=1 // loop_pre_header
      _
    $region3: #{attention_forward.1} parent=1 // loop_header
      %s13 = sphi 0, %s17
      %p14 = scmp.ge.s32.totalorder %s13, 4
      %s23 = sphi 0, %s25
      %s26 = sphi 0, %s23
      %s27 = sphi 0, %s26
      %s43 = sphi 0, %s27
      %s47 = sphi 0, %s47
      %s49 = sphi 0, %s47
      %s50 = sphi 0, %s49
      %s64 = sphi 0, %s50
      %s68 = sphi 0, %s68
      %s70 = sphi 0, %s68
      %s71 = sphi 0, %s70
      %s85 = sphi 0, %s71
      %s89 = sphi 0, %s89
      %s91 = sphi 0, %s89
      %s92 = sphi 0, %s91
      %s106 = sphi 0, %s92
      %s110 = sphi 0, %s110
      %s112 = sphi 0, %s110
      %s113 = sphi 0, %s112
      %s127 = sphi 0, %s113
      %s131 = sphi 0, %s131
      %s133 = sphi 0, %s131
      %s134 = sphi 0, %s133
      %s148 = sphi 0, %s134
      %s152 = sphi 0, %s152
      %s154 = sphi 0, %s152
      %s155 = sphi 0, %s154
      %s169 = sphi 0, %s155
      %s175 = sphi 0, %s177
      %s178 = sphi 0, %s175
      %s179 = sphi 0, %s178
      %s195 = sphi 0, %s179
    $region4: #{attention_forward.1} parent=1 // loop_header_branch
      %16 = sbr.rel (%p14) target = $region8
    $region5: #{attention_forward.1} parent=1 // loop_body
      %s18 = ssub.s32 %s13, 1
      %s19 = ssub.s32 %s13, 2
      %s20 = sadd.s32 %s13, 1
      %s21 = ssub.s32 %s13, %s20
      %p22 = scmp.eq.s32.totalorder %s21, 0
      %s24 = sadd.s32 %s23, 1
      %s25 = scalar_select %p22, %s23, %s24
      %p28 = pneg %p22
      %p29 = scmp.eq.s32.totalorder %s13, 1
      %p30 = por %p28, %p29
      %p31 = scmp.ne.s32.totalorder %s23, %s26
      %p32 = scmp.eq.s32.totalorder %s13, 0
      %p33 = por %p31, %p32
      %p34 = scmp.ne.s32.totalorder %s23, %s26
      %p35 = scmp.eq.s32.totalorder %s18, 1
      %p36 = por %p34, %p35
      %p37 = scmp.ne.s32.totalorder %s26, %s27
      %p38 = scmp.eq.s32.totalorder %s18, 0
      %p39 = por %p37, %p38
      %p40 = scmp.ne.s32.totalorder %s26, %s27
      %p41 = scmp.eq.s32.totalorder %s19, 1
      %p42 = por %p40, %p41
      %p44 = scmp.ne.s32.totalorder %s27, %s43
      %p45 = scmp.eq.s32.totalorder %s19, 0
      %p46 = por %p44, %p45
      %s48 = sadd.s32 %s47, 1
      %p51 = scmp.eq.s32.totalorder %s13, 1
      %p52 = scmp.ne.s32.totalorder %s47, %s49
      %p53 = scmp.eq.s32.totalorder %s13, 0
      %p54 = por %p52, %p53
      %p55 = scmp.ne.s32.totalorder %s47, %s49
      %p56 = scmp.eq.s32.totalorder %s18, 1
      %p57 = por %p55, %p56
      %p58 = scmp.ne.s32.totalorder %s49, %s50
      %p59 = scmp.eq.s32.totalorder %s18, 0
      %p60 = por %p58, %p59
      %p61 = scmp.ne.s32.totalorder %s49, %s50
      %p62 = scmp.eq.s32.totalorder %s19, 1
      %p63 = por %p61, %p62
      %p65 = scmp.ne.s32.totalorder %s50, %s64
      %p66 = scmp.eq.s32.totalorder %s19, 0
      %p67 = por %p65, %p66
      %s69 = sadd.s32 %s68, 1
      %p72 = scmp.eq.s32.totalorder %s13, 1
      %p73 = scmp.ne.s32.totalorder %s68, %s70
      %p74 = scmp.eq.s32.totalorder %s13, 0
      %p75 = por %p73, %p74
      %p76 = scmp.ne.s32.totalorder %s68, %s70
      %p77 = scmp.eq.s32.totalorder %s18, 1
      %p78 = por %p76, %p77
      %p79 = scmp.ne.s32.totalorder %s70, %s71
      %p80 = scmp.eq.s32.totalorder %s18, 0
      %p81 = por %p79, %p80
      %p82 = scmp.ne.s32.totalorder %s70, %s71
      %p83 = scmp.eq.s32.totalorder %s19, 1
      %p84 = por %p82, %p83
      %p86 = scmp.ne.s32.totalorder %s71, %s85
      %p87 = scmp.eq.s32.totalorder %s19, 0
      %p88 = por %p86, %p87
      %s90 = sadd.s32 %s89, 1
      %p93 = scmp.eq.s32.totalorder %s13, 1
      %p94 = scmp.ne.s32.totalorder %s89, %s91
      %p95 = scmp.eq.s32.totalorder %s13, 0
      %p96 = por %p94, %p95
      %p97 = scmp.ne.s32.totalorder %s89, %s91
      %p98 = scmp.eq.s32.totalorder %s18, 1
      %p99 = por %p97, %p98
      %p100 = scmp.ne.s32.totalorder %s91, %s92
      %p101 = scmp.eq.s32.totalorder %s18, 0
      %p102 = por %p100, %p101
      %p103 = scmp.ne.s32.totalorder %s91, %s92
      %p104 = scmp.eq.s32.totalorder %s19, 1
      %p105 = por %p103, %p104
      %p107 = scmp.ne.s32.totalorder %s92, %s106
      %p108 = scmp.eq.s32.totalorder %s19, 0
      %p109 = por %p107, %p108
      %s111 = sadd.s32 %s110, 1
      %p114 = scmp.eq.s32.totalorder %s13, 1
      %p115 = scmp.ne.s32.totalorder %s110, %s112
      %p116 = scmp.eq.s32.totalorder %s13, 0
      %p117 = por %p115, %p116
      %p118 = scmp.ne.s32.totalorder %s110, %s112
      %p119 = scmp.eq.s32.totalorder %s18, 1
      %p120 = por %p118, %p119
      %p121 = scmp.ne.s32.totalorder %s112, %s113
      %p122 = scmp.eq.s32.totalorder %s18, 0
      %p123 = por %p121, %p122
      %p124 = scmp.ne.s32.totalorder %s112, %s113
      %p125 = scmp.eq.s32.totalorder %s19, 1
      %p126 = por %p124, %p125
      %p128 = scmp.ne.s32.totalorder %s113, %s127
      %p129 = scmp.eq.s32.totalorder %s19, 0
      %p130 = por %p128, %p129
      %s132 = sadd.s32 %s131, 1
      %p135 = scmp.eq.s32.totalorder %s13, 1
      %p136 = scmp.ne.s32.totalorder %s131, %s133
      %p137 = scmp.eq.s32.totalorder %s13, 0
      %p138 = por %p136, %p137
      %p139 = scmp.ne.s32.totalorder %s131, %s133
      %p140 = scmp.eq.s32.totalorder %s18, 1
      %p141 = por %p139, %p140
      %p142 = scmp.ne.s32.totalorder %s133, %s134
      %p143 = scmp.eq.s32.totalorder %s18, 0
      %p144 = por %p142, %p143
      %p145 = scmp.ne.s32.totalorder %s133, %s134
      %p146 = scmp.eq.s32.totalorder %s19, 1
      %p147 = por %p145, %p146
      %p149 = scmp.ne.s32.totalorder %s134, %s148
      %p150 = scmp.eq.s32.totalorder %s19, 0
      %p151 = por %p149, %p150
      %s153 = sadd.s32 %s152, 1
      %p156 = scmp.eq.s32.totalorder %s13, 1
      %p157 = scmp.ne.s32.totalorder %s152, %s154
      %p158 = scmp.eq.s32.totalorder %s13, 0
      %p159 = por %p157, %p158
      %p160 = scmp.ne.s32.totalorder %s152, %s154
      %p161 = scmp.eq.s32.totalorder %s18, 1
      %p162 = por %p160, %p161
      %p163 = scmp.ne.s32.totalorder %s154, %s155
      %p164 = scmp.eq.s32.totalorder %s18, 0
      %p165 = por %p163, %p164
      %p166 = scmp.ne.s32.totalorder %s154, %s155
      %p167 = scmp.eq.s32.totalorder %s19, 1
      %p168 = por %p166, %p167
      %p170 = scmp.ne.s32.totalorder %s155, %s169
      %p171 = scmp.eq.s32.totalorder %s19, 0
      %p172 = por %p170, %p171
      %s173 = ssub.s32 %s13, %s20
      %p174 = scmp.eq.s32.totalorder %s173, 0
      %s176 = sadd.s32 %s175, 1
      %s177 = scalar_select %p174, %s175, %s176
      %p180 = pneg %p174
      %p181 = scmp.eq.s32.totalorder %s13, 1
      %p182 = por %p180, %p181
      %p183 = scmp.ne.s32.totalorder %s175, %s178
      %p184 = scmp.eq.s32.totalorder %s13, 0
      %p185 = por %p183, %p184
      %p186 = scmp.ne.s32.totalorder %s175, %s178
      %p187 = scmp.eq.s32.totalorder %s18, 1
      %p188 = por %p186, %p187
      %p189 = scmp.ne.s32.totalorder %s178, %s179
      %p190 = scmp.eq.s32.totalorder %s18, 0
      %p191 = por %p189, %p190
      %p192 = scmp.ne.s32.totalorder %s178, %s179
      %p193 = scmp.eq.s32.totalorder %s19, 1
      %p194 = por %p192, %p193
      %p196 = scmp.ne.s32.totalorder %s179, %s195
      %p197 = scmp.eq.s32.totalorder %s19, 0
      %p198 = por %p196, %p197
      %p199 = scmp.le.s32.totalorder 1, %s13
      %p200 = scmp.lt.s32.totalorder %s13, 3
      %p201 = pnand %p199, %p200
      %p202 = pneg %p201
      // Predicated region
      $region9: #{attention_forward.1} parent=5 // pred_check
        _
      $region10: #{attention_forward.1} parent=5 // pred_check_branch
        %204 = sbr.rel (%p201) target = $region12
      $region11: #{attention_forward.1} parent=5 // pred_region
        %s205 = ssub.s32 %s13, 1
        // Predicated region
        $region13: #{attention_forward.1} parent=11 // pred_check
          %p206 = pneg %p60
        $region14: #{attention_forward.1} parent=11 // pred_check_branch
          %208 = sbr.rel (%p206) target = $region16
        $region15: #{attention_forward.1} parent=11 // pred_region
          _
        $region16: #{attention_forward.1} parent=11 // pred_fallthru
          _
        // Predicated region
        $region17: #{attention_forward.1} parent=11 // pred_check
          %p209 = pneg %p81
        $region18: #{attention_forward.1} parent=11 // pred_check_branch
          %211 = sbr.rel (%p209) target = $region20
        $region19: #{attention_forward.1} parent=11 // pred_region
          _
        $region20: #{attention_forward.1} parent=11 // pred_fallthru
          _
        // Predicated region
        $region21: #{attention_forward.1} parent=11 // pred_check
          %p212 = pneg %p102
        $region22: #{attention_forward.1} parent=11 // pred_check_branch
          %214 = sbr.rel (%p212) target = $region24
        $region23: #{attention_forward.1} parent=11 // pred_region
          _
        $region24: #{attention_forward.1} parent=11 // pred_fallthru
          _
        // Predicated region
        $region25: #{attention_forward.1} parent=11 // pred_check
          %p215 = pneg %p123
        $region26: #{attention_forward.1} parent=11 // pred_check_branch
          %217 = sbr.rel (%p215) target = $region28
        $region27: #{attention_forward.1} parent=11 // pred_region
          _
        $region28: #{attention_forward.1} parent=11 // pred_fallthru
          _
        // Predicated region
        $region29: #{attention_forward.1} parent=11 // pred_check
          %p218 = pneg %p144
        $region30: #{attention_forward.1} parent=11 // pred_check_branch
          %220 = sbr.rel (%p218) target = $region32
        $region31: #{attention_forward.1} parent=11 // pred_region
          _
        $region32: #{attention_forward.1} parent=11 // pred_fallthru
          _
        // Predicated region
        $region33: #{attention_forward.1} parent=11 // pred_check
          %p221 = pneg %p165
        $region34: #{attention_forward.1} parent=11 // pred_check_branch
          %223 = sbr.rel (%p221) target = $region36
        $region35: #{attention_forward.1} parent=11 // pred_region
          _
        $region36: #{attention_forward.1} parent=11 // pred_fallthru
          _
      $region12: #{attention_forward.1} parent=5 // pred_fallthru
        _
      %p224 = scmp.lt.s32.totalorder %s13, 2
      // Predicated region
      $region37: #{attention_forward.1} parent=5 // pred_check
        %p225 = pneg %p224
      $region38: #{attention_forward.1} parent=5 // pred_check_branch
        %227 = sbr.rel (%p225) target = $region40
      $region39: #{attention_forward.1} parent=5 // pred_region
        // Predicated region
        $region41: #{attention_forward.1} parent=39 // pred_check
          %p228 = pneg %p33
        $region42: #{attention_forward.1} parent=39 // pred_check_branch
          %230 = sbr.rel (%p228) target = $region44
        $region43: #{attention_forward.1} parent=39 // pred_region
          %s231 = sand.u32 %s23, 1
          %s232 = sand.u32 %s23, 1
          %s233 = smul.addr %s232, 96
          %s234 = scalar_lea.vmem [#allocation2], %s233
          %s235 = smul.u32 3, %s13
          %s236 = smul.addr %s235, 8
          %s237 = scalar_lea.vmem %s0, %s236
          // Predicated region
          $region45: #{attention_forward.1} parent=43 // pred_check
            _
          $region46: #{attention_forward.1} parent=43 // pred_check_branch
            %239 = sbr.rel (0) target = $region48
          $region47: #{attention_forward.1} parent=43 // pred_region
            // Predicated region
            $region49: #{attention_forward.1} parent=47 // pred_check
              _
            $region50: #{attention_forward.1} parent=47 // pred_check_branch
              %241 = sbr.rel (0) target = $region52
            $region51: #{attention_forward.1} parent=47 // pred_region
              loop: start=0, step=1, limit=1
              $region53: #{attention_forward.1} parent=51 // loop_pre_header
                _
              $region54: #{attention_forward.1} parent=51 // loop_header
                %s243 = sphi 0, %s247
                %p244 = scmp.ge.s32.totalorder %s243, 1
                %s248 = sphi %s237, %s237
                %s249 = sphi %s234, %s234
              $region55: #{attention_forward.1} parent=51 // loop_header_branch
                %246 = sbr.rel (%p244) target = $region59
              $region56: #{attention_forward.1} parent=51 // loop_body
                %v250 = vld [vmem:[%s248] sm:$0xff]
                %251 = vst [vmem:[%s249] sm:$0xff] %v250
                %v252 = vld [vmem:[%s248 + $0x8] sm:$0xff]
                %253 = vst [vmem:[%s249 + $0x8] sm:$0xff] %v252
                %v254 = vld [vmem:[%s248 + $0x10] sm:$0xff]
                %255 = vst [vmem:[%s249 + $0x10] sm:$0xff] %v254
                %v256 = vld [vmem:[%s248 + $0x30] sm:$0xff]
                %257 = vst [vmem:[%s249 + $0x18] sm:$0xff] %v256
                %v258 = vld [vmem:[%s248 + $0x38] sm:$0xff]
                %259 = vst [vmem:[%s249 + $0x20] sm:$0xff] %v258
                %v260 = vld [vmem:[%s248 + $0x40] sm:$0xff]
                %261 = vst [vmem:[%s249 + $0x28] sm:$0xff] %v260
                %v262 = vld [vmem:[%s248 + $0x60] sm:$0xff]
                %263 = vst [vmem:[%s249 + $0x30] sm:$0xff] %v262
                %v264 = vld [vmem:[%s248 + $0x68] sm:$0xff]
                %265 = vst [vmem:[%s249 + $0x38] sm:$0xff] %v264
                %v266 = vld [vmem:[%s248 + $0x70] sm:$0xff]
                %267 = vst [vmem:[%s249 + $0x40] sm:$0xff] %v266
                %v268 = vld [vmem:[%s248 + $0x90] sm:$0xff]
                %269 = vst [vmem:[%s249 + $0x48] sm:$0xff] %v268
                %v270 = vld [vmem:[%s248 + $0x98] sm:$0xff]
                %271 = vst [vmem:[%s249 + $0x50] sm:$0xff] %v270
                %v272 = vld [vmem:[%s248 + $0xa0] sm:$0xff]
                %273 = vst [vmem:[%s249 + $0x58] sm:$0xff] %v272
              $region57: #{attention_forward.1} parent=51 // loop_footer
                %s247 = sadd.s32 1, %s243
              $region58: #{attention_forward.1} parent=51 // loop_footer_branch
                %242 = sbr.rel target = $region54
              $region59: #{attention_forward.1} parent=51 // loop_exit
                _
            $region52: #{attention_forward.1} parent=47 // pred_fallthru
              _
            // Predicated region
            $region60: #{attention_forward.1} parent=47 // pred_check
              _
            $region61: #{attention_forward.1} parent=47 // pred_check_branch
              %275 = sbr.rel target = $region63
            $region62: #{attention_forward.1} parent=47 // pred_region
              _
            $region63: #{attention_forward.1} parent=47 // pred_fallthru
              _
          $region48: #{attention_forward.1} parent=43 // pred_fallthru
            _
          %276 = vnop
        $region44: #{attention_forward.1} parent=39 // pred_fallthru
          _
      $region40: #{attention_forward.1} parent=5 // pred_fallthru
        _
      %p277 = scmp.le.s32.totalorder 1, %s13
      %p278 = scmp.lt.s32.totalorder %s13, 3
      %p279 = pnand %p277, %p278
      %p280 = pneg %p279
      // Predicated region
      $region64: #{attention_forward.1} parent=5 // pred_check
        _
      $region65: #{attention_forward.1} parent=5 // pred_check_branch
        %282 = sbr.rel (%p279) target = $region67
      $region66: #{attention_forward.1} parent=5 // pred_region
        %s283 = ssub.s32 %s13, 1
        %s284 = sand.u32 %s26, 1
        %s285 = sand.u32 %s26, 1
        %s286 = smul.addr %s285, 96
        %s287 = scalar_lea.vmem [#allocation2], %s286
        // Predicated region
        $region68: #{attention_forward.1} parent=66 // pred_check
          %p288 = pneg %p39
        $region69: #{attention_forward.1} parent=66 // pred_check_branch
          %290 = sbr.rel (%p288) target = $region71
        $region70: #{attention_forward.1} parent=66 // pred_region
          _
        $region71: #{attention_forward.1} parent=66 // pred_fallthru
          _
        %s291 = sand.u32 %s26, 1
        %s292 = sand.u32 %s26, 1
        %s293 = smul.addr %s292, 96
        %s294 = scalar_lea.vmem [#allocation2], %s293
        %p295 = pneg %p39
        %p296 = pneg %p36
        %p297 = pneg %p60
        %p298 = pneg %p57
        %p299 = pneg %p81
        %p300 = pneg %p78
        %p301 = pneg %p102
        %p302 = pneg %p99
        %p303 = pneg %p123
        %p304 = pneg %p120
        %p305 = pneg %p144
        %p306 = pneg %p141
        %p307 = pneg %p165
        %p308 = pneg %p162
        %p309 = pneg %p191
        %p310 = pneg %p188
        %s311 = sand.u32 %s178, 1
        %s312 = sand.u32 %s178, 1
        %s313 = smul.addr %s312, 96
        %s314 = scalar_lea.vmem [#allocation3], %s313
        %s315 = smul.u32 3, %s18
        %s316 = smul.u32 3, %s18
        %v317 = vld [vmem:[%s287] sm:$0xff]
        %v318 = vld [vmem:[%s287 + $0x8] sm:$0xff]
        %v319 = vld [vmem:[%s287 + $0x10] sm:$0xff]
        %v320 = vld [vmem:[%s287 + $0x18] sm:$0xff]
        %v321 = vld [vmem:[%s287 + $0x20] sm:$0xff]
        %v322 = vld [vmem:[%s287 + $0x28] sm:$0xff]
        %v323 = vld [vmem:[%s287 + $0x30] sm:$0xff]
        %v324 = vld [vmem:[%s287 + $0x38] sm:$0xff]
        %v325 = vld [vmem:[%s287 + $0x40] sm:$0xff]
        %v326 = vld [vmem:[%s287 + $0x48] sm:$0xff]
        %v327 = vld [vmem:[%s287 + $0x50] sm:$0xff]
        %v328 = vld [vmem:[%s287 + $0x58] sm:$0xff]
        %v329 = vld [vmem:[%s1] sm:$0xff]
        %v330 = vld [vmem:[%s1 + $0x8] sm:$0xff]
        %v331 = vld [vmem:[%s2] sm:$0xff]
        %v332 = vld [vmem:[%s2 + $0x8] sm:$0xff]
        %v333 = vld [vmem:[%s2 + $0x10] sm:$0xff]
        %v334 = vld [vmem:[%s2 + $0x18] sm:$0xff]
        %v335 = vld [vmem:[%s2 + $0x20] sm:$0xff]
        %v336 = vld [vmem:[%s2 + $0x28] sm:$0xff]
        %vm337 = vcmask 261120
        %v339 = vsel %vm337, %v329, 0
        %v342 = vsel %vm337, %v330, 0
        %344 = vmatprep.subr.mxu0 %v318
        %345 = vmatpush1.msra.mxu0 %v317
        %346 = vmatprep.subr.mxu0 %v321
        %347 = vmatpush1.msra.mxu0 %v320
        %348 = vmatprep.subr.mxu0 %v324
        %349 = vmatpush1.msra.mxu0 %v323
        %350 = vmatprep.subr.mxu0 %v327
        %351 = vmatpush1.msra.mxu0 %v326
        %352 = vmatprep.subr.mxu0 0.0
        %353 = vmatpush1.msra.mxu0 0.0
        %354 = vmatprep.subr.mxu0 0.0
        %355 = vmatpush1.msra.mxu0 0.0
        %356 = vmatprep.subr.mxu0 0.0
        %357 = vmatpush1.msra.mxu0 0.0
        %358 = vmatprep.subr.mxu0 0.0
        %359 = vmatpush1.msra.mxu0 0.0
        %360 = vmatprep.subr.mxu0 0.0
        %361 = vmatpush1.msra.mxu0 0.0
        %362 = vmatprep.subr.mxu0 0.0
        %363 = vmatpush1.msra.mxu0 0.0
        %364 = vmatprep.subr.mxu0 0.0
        %365 = vmatpush1.msra.mxu0 0.0
        %366 = vmatprep.subr.mxu0 0.0
        %367 = vmatpush1.msra.mxu0 0.0
        %368 = vmatprep.subr.mxu0 0.0
        %369 = vmatpush1.msra.mxu0 0.0
        %370 = vmatprep.subr.mxu0 0.0
        %371 = vmatpush1.msra.mxu0 0.0
        %372 = vmatprep.subr.mxu0 0.0
        %373 = vmatpush1.msra.mxu0 0.0
        %374 = vmatprep.subr.mxu0 0.0
        %375 = vmatpush1.msra.mxu0 0.0
        %376 = vmatprep.subr.mxu0 0.0
        %377 = vmatpush1.msra.mxu0 0.0
        %378 = vmatprep.subr.mxu0 0.0
        %379 = vmatpush1.msra.mxu0 0.0
        %380 = vmatprep.subr.mxu0 0.0
        %381 = vmatpush1.msra.mxu0 0.0
        %382 = vmatprep.subr.mxu0 0.0
        %383 = vmatpush1.msra.mxu0 0.0
        %384 = vmatprep.subr.mxu0 0.0
        %385 = vmatpush1.msra.mxu0 0.0
        %386 = vmatprep.subr.mxu0 0.0
        %387 = vmatpush1.msra.mxu0 0.0
        %388 = vmatprep.subr.mxu0 0.0
        %389 = vmatpush1.msra.mxu0 0.0
        %390 = vmatprep.subr.mxu0 0.0
        %391 = vmatpush1.msra.mxu0 0.0
        %392 = vmatprep.subr.mxu0 0.0
        %393 = vmatpush1.msra.mxu0 0.0
        %394 = vmatprep.subr.mxu0 0.0
        %395 = vmatpush1.msra.mxu0 0.0
        %396 = vmatprep.subr.mxu0 0.0
        %397 = vmatpush1.msra.mxu0 0.0
        %398 = vmatprep.subr.mxu0 0.0
        %399 = vmatpush1.msra.mxu0 0.0
        %400 = vmatprep.subr.mxu0 0.0
        %401 = vmatpush1.msra.mxu0 0.0
        %402 = vmatprep.subr.mxu0 0.0
        %403 = vmatpush1.msra.mxu0 0.0
        %404 = vmatprep.subr.mxu0 0.0
        %405 = vmatpush1.msra.mxu0 0.0
        %406 = vmatprep.subr.mxu0 0.0
        %407 = vmatpush1.msra.mxu0 0.0
        %408 = vmatprep.mubr.f32.mxu0 0.0
        %409 = vmatmul.mubr.f32.gmra.mrb[0].mxu0 %v339
        %v410 = vpop.f32.mrb[0].mxu0
        %v411 = vadd.f32 %v331, %v410
        %v412 = vpop.f32.mrb[0].mxu0
        %v413 = vadd.f32 %v332, %v412
        %414 = vmatprep.mubr.f32.mxu0 0.0
        %415 = vmatmul.mubr.f32.gmra.mrb[0].mxu0 %v342
        %v416 = vpop.f32.mrb[0].mxu0
        %v417 = vadd.f32 %v334, %v416
        %v418 = vpop.f32.mrb[0].mxu0
        %v419 = vadd.f32 %v335, %v418
        %420 = vdwg.mxu0
        %421 = vmatprep.subr.mxu0 0.0
        %422 = vmatpush1.msra.mxu0 %v319
        %423 = vmatprep.subr.mxu0 0.0
        %424 = vmatpush1.msra.mxu0 %v322
        %425 = vmatprep.subr.mxu0 0.0
        %426 = vmatpush1.msra.mxu0 %v325
        %427 = vmatprep.subr.mxu0 0.0
        %428 = vmatpush1.msra.mxu0 %v328
        %429 = vmatprep.subr.mxu0 0.0
        %430 = vmatpush1.msra.mxu0 0.0
        %431 = vmatprep.subr.mxu0 0.0
        %432 = vmatpush1.msra.mxu0 0.0
        %433 = vmatprep.subr.mxu0 0.0
        %434 = vmatpush1.msra.mxu0 0.0
        %435 = vmatprep.subr.mxu0 0.0
        %436 = vmatpush1.msra.mxu0 0.0
        %437 = vmatprep.subr.mxu0 0.0
        %438 = vmatpush1.msra.mxu0 0.0
        %439 = vmatprep.subr.mxu0 0.0
        %440 = vmatpush1.msra.mxu0 0.0
        %441 = vmatprep.subr.mxu0 0.0
        %442 = vmatpush1.msra.mxu0 0.0
        %443 = vmatprep.subr.mxu0 0.0
        %444 = vmatpush1.msra.mxu0 0.0
        %445 = vmatprep.subr.mxu0 0.0
        %446 = vmatpush1.msra.mxu0 0.0
        %447 = vmatprep.subr.mxu0 0.0
        %448 = vmatpush1.msra.mxu0 0.0
        %449 = vmatprep.subr.mxu0 0.0
        %450 = vmatpush1.msra.mxu0 0.0
        %451 = vmatprep.subr.mxu0 0.0
        %452 = vmatpush1.msra.mxu0 0.0
        %453 = vmatprep.subr.mxu0 0.0
        %454 = vmatpush1.msra.mxu0 0.0
        %455 = vmatprep.subr.mxu0 0.0
        %456 = vmatpush1.msra.mxu0 0.0
        %457 = vmatprep.subr.mxu0 0.0
        %458 = vmatpush1.msra.mxu0 0.0
        %459 = vmatprep.subr.mxu0 0.0
        %460 = vmatpush1.msra.mxu0 0.0
        %461 = vmatprep.subr.mxu0 0.0
        %462 = vmatpush1.msra.mxu0 0.0
        %463 = vmatprep.subr.mxu0 0.0
        %464 = vmatpush1.msra.mxu0 0.0
        %465 = vmatprep.subr.mxu0 0.0
        %466 = vmatpush1.msra.mxu0 0.0
        %467 = vmatprep.subr.mxu0 0.0
        %468 = vmatpush1.msra.mxu0 0.0
        %469 = vmatprep.subr.mxu0 0.0
        %470 = vmatpush1.msra.mxu0 0.0
        %471 = vmatprep.subr.mxu0 0.0
        %472 = vmatpush1.msra.mxu0 0.0
        %473 = vmatprep.subr.mxu0 0.0
        %474 = vmatpush1.msra.mxu0 0.0
        %475 = vmatprep.subr.mxu0 0.0
        %476 = vmatpush1.msra.mxu0 0.0
        %477 = vmatprep.subr.mxu0 0.0
        %478 = vmatpush1.msra.mxu0 0.0
        %479 = vmatprep.subr.mxu0 0.0
        %480 = vmatpush1.msra.mxu0 0.0
        %481 = vmatprep.subr.mxu0 0.0
        %482 = vmatpush1.msra.mxu0 0.0
        %483 = vmatprep.subr.mxu0 0.0
        %484 = vmatpush1.msra.mxu0 0.0
        %485 = vmatprep.mubr.f32.mxu0 0.0
        %486 = vmatmul.mubr.f32.gmra.mrb[0].mxu0 %v339
        %v487 = vpop.f32.mrb[0].mxu0
        %v488 = vadd.f32 %v333, %v487
        %v489 = vpop.f32.mrb[0].mxu0
        %490 = vmatprep.mubr.f32.mxu0 0.0
        %491 = vmatmul.mubr.f32.gmra.mrb[0].mxu0 %v342
        %v492 = vpop.f32.mrb[0].mxu0
        %v493 = vadd.f32 %v336, %v492
        %v494 = vpop.f32.mrb[0].mxu0
        %495 = vdwg.mxu0
        %vm496 = vcmp.ge.f32.partialorder %v411, 0.0
        %vm497 = vcmp.ge.f32.partialorder %v413, 0.0
        %vm498 = vcmp.ge.f32.partialorder %v488, 0.0
        %vm499 = vcmp.ge.f32.partialorder %v417, 0.0
        %vm500 = vcmp.ge.f32.partialorder %v419, 0.0
        %vm501 = vcmp.ge.f32.partialorder %v493, 0.0
        %v502 = vmul.f32 %v411, 0.2
        %v503 = vmul.f32 %v413, 0.2
        %v504 = vmul.f32 %v488, 0.2
        %v505 = vmul.f32 %v417, 0.2
        %v506 = vmul.f32 %v419, 0.2
        %v507 = vmul.f32 %v493, 0.2
        %v508 = vsel %vm496, %v411, %v502
        %v509 = vsel %vm497, %v413, %v503
        %v510 = vsel %vm498, %v488, %v504
        %v511 = vsel %vm499, %v417, %v505
        %v512 = vsel %vm500, %v419, %v506
        %v513 = vsel %vm501, %v493, %v507
        %v514 = vld [vmem:[%s3] sm:$0xff]
        %v515 = vld [vmem:[%s3 + $0x8] sm:$0xff]
        %v516 = vld [vmem:[%s4] sm:$0xff]
        %v517 = vld [vmem:[%s4 + $0x8] sm:$0xff]
        %v518 = vld [vmem:[%s4 + $0x10] sm:$0xff]
        %v519 = vld [vmem:[%s4 + $0x18] sm:$0xff]
        %v520 = vld [vmem:[%s4 + $0x20] sm:$0xff]
        %v521 = vld [vmem:[%s4 + $0x28] sm:$0xff]
        %vm522 = vcmask 130048
        %v524 = vsel %vm522, %v514, 0
        %v527 = vsel %vm522, %v515, 0
        %529 = vmatprep.subr.mxu0 %v509
        %530 = vmatpush1.msra.mxu0 %v508
        %531 = vmatprep.subr.mxu0 %v512
        %532 = vmatpush1.msra.mxu0 %v511
        %533 = vmatprep.subr.mxu0 0.0
        %534 = vmatpush1.msra.mxu0 0.0
        %535 = vmatprep.subr.mxu0 0.0
        %536 = vmatpush1.msra.mxu0 0.0
        %537 = vmatprep.subr.mxu0 0.0
        %538 = vmatpush1.msra.mxu0 0.0
        %539 = vmatprep.subr.mxu0 0.0
        %540 = vmatpush1.msra.mxu0 0.0
        %541 = vmatprep.subr.mxu0 0.0
        %542 = vmatpush1.msra.mxu0 0.0
        %543 = vmatprep.subr.mxu0 0.0
        %544 = vmatpush1.msra.mxu0 0.0
        %545 = vmatprep.subr.mxu0 0.0
        %546 = vmatpush1.msra.mxu0 0.0
        %547 = vmatprep.subr.mxu0 0.0
        %548 = vmatpush1.msra.mxu0 0.0
        %549 = vmatprep.subr.mxu0 0.0
        %550 = vmatpush1.msra.mxu0 0.0
        %551 = vmatprep.subr.mxu0 0.0
        %552 = vmatpush1.msra.mxu0 0.0
        %553 = vmatprep.subr.mxu0 0.0
        %554 = vmatpush1.msra.mxu0 0.0
        %555 = vmatprep.subr.mxu0 0.0
        %556 = vmatpush1.msra.mxu0 0.0
        %557 = vmatprep.subr.mxu0 0.0
        %558 = vmatpush1.msra.mxu0 0.0
        %559 = vmatprep.subr.mxu0 0.0
        %560 = vmatpush1.msra.mxu0 0.0
        %561 = vmatprep.subr.mxu0 0.0
        %562 = vmatpush1.msra.mxu0 0.0
        %563 = vmatprep.subr.mxu0 0.0
        %564 = vmatpush1.msra.mxu0 0.0
        %565 = vmatprep.subr.mxu0 0.0
        %566 = vmatpush1.msra.mxu0 0.0
        %567 = vmatprep.subr.mxu0 0.0
        %568 = vmatpush1.msra.mxu0 0.0
        %569 = vmatprep.subr.mxu0 0.0
        %570 = vmatpush1.msra.mxu0 0.0
        %571 = vmatprep.subr.mxu0 0.0
        %572 = vmatpush1.msra.mxu0 0.0
        %573 = vmatprep.subr.mxu0 0.0
        %574 = vmatpush1.msra.mxu0 0.0
        %575 = vmatprep.subr.mxu0 0.0
        %576 = vmatpush1.msra.mxu0 0.0
        %577 = vmatprep.subr.mxu0 0.0
        %578 = vmatpush1.msra.mxu0 0.0
        %579 = vmatprep.subr.mxu0 0.0
        %580 = vmatpush1.msra.mxu0 0.0
        %581 = vmatprep.subr.mxu0 0.0
        %582 = vmatpush1.msra.mxu0 0.0
        %583 = vmatprep.subr.mxu0 0.0
        %584 = vmatpush1.msra.mxu0 0.0
        %585 = vmatprep.subr.mxu0 0.0
        %586 = vmatpush1.msra.mxu0 0.0
        %587 = vmatprep.subr.mxu0 0.0
        %588 = vmatpush1.msra.mxu0 0.0
        %589 = vmatprep.subr.mxu0 0.0
        %590 = vmatpush1.msra.mxu0 0.0
        %591 = vmatprep.subr.mxu0 0.0
        %592 = vmatpush1.msra.mxu0 0.0
        %593 = vmatprep.mubr.f32.mxu0 0.0
        %594 = vmatmul.mubr.f32.gmra.mrb[0].mxu0 %v524
        %v595 = vpop.f32.mrb[0].mxu0
        %v596 = vadd.f32 %v516, %v595
        %v597 = vpop.f32.mrb[0].mxu0
        %v598 = vadd.f32 %v517, %v597
        %599 = vmatprep.mubr.f32.mxu0 0.0
        %600 = vmatmul.mubr.f32.gmra.mrb[0].mxu0 %v527
        %v601 = vpop.f32.mrb[0].mxu0
        %v602 = vadd.f32 %v519, %v601
        %v603 = vpop.f32.mrb[0].mxu0
        %v604 = vadd.f32 %v520, %v603
        %605 = vdwg.mxu0
        %606 = vmatprep.subr.mxu0 0.0
        %607 = vmatpush1.msra.mxu0 %v510
        %608 = vmatprep.subr.mxu0 0.0
        %609 = vmatpush1.msra.mxu0 %v513
        %610 = vmatprep.subr.mxu0 0.0
        %611 = vmatpush1.msra.mxu0 0.0
        %612 = vmatprep.subr.mxu0 0.0
        %613 = vmatpush1.msra.mxu0 0.0
        %614 = vmatprep.subr.mxu0 0.0
        %615 = vmatpush1.msra.mxu0 0.0
        %616 = vmatprep.subr.mxu0 0.0
        %617 = vmatpush1.msra.mxu0 0.0
        %618 = vmatprep.subr.mxu0 0.0
        %619 = vmatpush1.msra.mxu0 0.0
        %620 = vmatprep.subr.mxu0 0.0
        %621 = vmatpush1.msra.mxu0 0.0
        %622 = vmatprep.subr.mxu0 0.0
        %623 = vmatpush1.msra.mxu0 0.0
        %624 = vmatprep.subr.mxu0 0.0
        %625 = vmatpush1.msra.mxu0 0.0
        %626 = vmatprep.subr.mxu0 0.0
        %627 = vmatpush1.msra.mxu0 0.0
        %628 = vmatprep.subr.mxu0 0.0
        %629 = vmatpush1.msra.mxu0 0.0
        %630 = vmatprep.subr.mxu0 0.0
        %631 = vmatpush1.msra.mxu0 0.0
        %632 = vmatprep.subr.mxu0 0.0
        %633 = vmatpush1.msra.mxu0 0.0
        %634 = vmatprep.subr.mxu0 0.0
        %635 = vmatpush1.msra.mxu0 0.0
        %636 = vmatprep.subr.mxu0 0.0
        %637 = vmatpush1.msra.mxu0 0.0
        %638 = vmatprep.subr.mxu0 0.0
        %639 = vmatpush1.msra.mxu0 0.0
        %640 = vmatprep.subr.mxu0 0.0
        %641 = vmatpush1.msra.mxu0 0.0
        %642 = vmatprep.subr.mxu0 0.0
        %643 = vmatpush1.msra.mxu0 0.0
        %644 = vmatprep.subr.mxu0 0.0
        %645 = vmatpush1.msra.mxu0 0.0
        %646 = vmatprep.subr.mxu0 0.0
        %647 = vmatpush1.msra.mxu0 0.0
        %648 = vmatprep.subr.mxu0 0.0
        %649 = vmatpush1.msra.mxu0 0.0
        %650 = vmatprep.subr.mxu0 0.0
        %651 = vmatpush1.msra.mxu0 0.0
        %652 = vmatprep.subr.mxu0 0.0
        %653 = vmatpush1.msra.mxu0 0.0
        %654 = vmatprep.subr.mxu0 0.0
        %655 = vmatpush1.msra.mxu0 0.0
        %656 = vmatprep.subr.mxu0 0.0
        %657 = vmatpush1.msra.mxu0 0.0
        %658 = vmatprep.subr.mxu0 0.0
        %659 = vmatpush1.msra.mxu0 0.0
        %660 = vmatprep.subr.mxu0 0.0
        %661 = vmatpush1.msra.mxu0 0.0
        %662 = vmatprep.subr.mxu0 0.0
        %663 = vmatpush1.msra.mxu0 0.0
        %664 = vmatprep.subr.mxu0 0.0
        %665 = vmatpush1.msra.mxu0 0.0
        %666 = vmatprep.subr.mxu0 0.0
        %667 = vmatpush1.msra.mxu0 0.0
        %668 = vmatprep.subr.mxu0 0.0
        %669 = vmatpush1.msra.mxu0 0.0
        %670 = vmatprep.mubr.f32.mxu0 0.0
        %671 = vmatmul.mubr.f32.gmra.mrb[0].mxu0 %v524
        %v672 = vpop.f32.mrb[0].mxu0
        %v673 = vadd.f32 %v518, %v672
        %v674 = vpop.f32.mrb[0].mxu0
        %675 = vmatprep.mubr.f32.mxu0 0.0
        %676 = vmatmul.mubr.f32.gmra.mrb[0].mxu0 %v527
        %v677 = vpop.f32.mrb[0].mxu0
        %v678 = vadd.f32 %v521, %v677
        %v679 = vpop.f32.mrb[0].mxu0
        %680 = vdwg.mxu0
        %vm681 = vcmp.ge.f32.partialorder %v596, 0.0
        %vm682 = vcmp.ge.f32.partialorder %v598, 0.0
        %vm683 = vcmp.ge.f32.partialorder %v673, 0.0
        %vm684 = vcmp.ge.f32.partialorder %v602, 0.0
        %vm685 = vcmp.ge.f32.partialorder %v604, 0.0
        %vm686 = vcmp.ge.f32.partialorder %v678, 0.0
        %v687 = vmul.f32 %v596, 0.2
        %v688 = vmul.f32 %v598, 0.2
        %v689 = vmul.f32 %v673, 0.2
        %v690 = vmul.f32 %v602, 0.2
        %v691 = vmul.f32 %v604, 0.2
        %v692 = vmul.f32 %v678, 0.2
        %v693 = vsel %vm681, %v596, %v687
        %v694 = vsel %vm682, %v598, %v688
        %v695 = vsel %vm683, %v673, %v689
        %v696 = vsel %vm684, %v602, %v690
        %v697 = vsel %vm685, %v604, %v691
        %v698 = vsel %vm686, %v678, %v692
        %v699 = vld [vmem:[%s5] sm:$0xff]
        %v700 = vld [vmem:[%s5 + $0x8] sm:$0xff]
        %v701 = vld [vmem:[%s5 + $0x10] sm:$0xff]
        %v702 = vld [vmem:[%s5 + $0x18] sm:$0xff]
        %v703 = vld [vmem:[%s6] sm:$0xff]
        %v704 = vld [vmem:[%s6 + $0x8] sm:$0xff]
        %v705 = vld [vmem:[%s6 + $0x10] sm:$0xff]
        %v706 = vld [vmem:[%s6 + $0x18] sm:$0xff]
        %v707 = vld [vmem:[%s6 + $0x20] sm:$0xff]
        %v708 = vld [vmem:[%s6 + $0x28] sm:$0xff]
        %v709 = vld [vmem:[%s6 + $0x30] sm:$0xff]
        %v710 = vld [vmem:[%s6 + $0x38] sm:$0xff]
        %v711 = vld [vmem:[%s6 + $0x40] sm:$0xff]
        %v712 = vld [vmem:[%s6 + $0x48] sm:$0xff]
        %v713 = vld [vmem:[%s6 + $0x50] sm:$0xff]
        %v714 = vld [vmem:[%s6 + $0x58] sm:$0xff]
        %v716 = vsel %vm522, %v699, 0
        %v719 = vsel %vm522, %v700, 0
        %v722 = vsel %vm522, %v701, 0
        %v725 = vsel %vm522, %v702, 0
        %727 = vmatprep.subr.mxu0 %v694
        %728 = vmatpush1.msra.mxu0 %v693
        %729 = vmatprep.subr.mxu0 %v697
        %730 = vmatpush1.msra.mxu0 %v696
        %731 = vmatprep.subr.mxu0 0.0
        %732 = vmatpush1.msra.mxu0 0.0
        %733 = vmatprep.subr.mxu0 0.0
        %734 = vmatpush1.msra.mxu0 0.0
        %735 = vmatprep.subr.mxu0 0.0
        %736 = vmatpush1.msra.mxu0 0.0
        %737 = vmatprep.subr.mxu0 0.0
        %738 = vmatpush1.msra.mxu0 0.0
        %739 = vmatprep.subr.mxu0 0.0
        %740 = vmatpush1.msra.mxu0 0.0
        %741 = vmatprep.subr.mxu0 0.0
        %742 = vmatpush1.msra.mxu0 0.0
        %743 = vmatprep.subr.mxu0 0.0
        %744 = vmatpush1.msra.mxu0 0.0
        %745 = vmatprep.subr.mxu0 0.0
        %746 = vmatpush1.msra.mxu0 0.0
        %747 = vmatprep.subr.mxu0 0.0
        %748 = vmatpush1.msra.mxu0 0.0
        %749 = vmatprep.subr.mxu0 0.0
        %750 = vmatpush1.msra.mxu0 0.0
        %751 = vmatprep.subr.mxu0 0.0
        %752 = vmatpush1.msra.mxu0 0.0
        %753 = vmatprep.subr.mxu0 0.0
        %754 = vmatpush1.msra.mxu0 0.0
        %755 = vmatprep.subr.mxu0 0.0
        %756 = vmatpush1.msra.mxu0 0.0
        %757 = vmatprep.subr.mxu0 0.0
        %758 = vmatpush1.msra.mxu0 0.0
        %759 = vmatprep.subr.mxu0 0.0
        %760 = vmatpush1.msra.mxu0 0.0
        %761 = vmatprep.subr.mxu0 0.0
        %762 = vmatpush1.msra.mxu0 0.0
        %763 = vmatprep.subr.mxu0 0.0
        %764 = vmatpush1.msra.mxu0 0.0
        %765 = vmatprep.subr.mxu0 0.0
        %766 = vmatpush1.msra.mxu0 0.0
        %767 = vmatprep.subr.mxu0 0.0
        %768 = vmatpush1.msra.mxu0 0.0
        %769 = vmatprep.subr.mxu0 0.0
        %770 = vmatpush1.msra.mxu0 0.0
        %771 = vmatprep.subr.mxu0 0.0
        %772 = vmatpush1.msra.mxu0 0.0
        %773 = vmatprep.subr.mxu0 0.0
        %774 = vmatpush1.msra.mxu0 0.0
        %775 = vmatprep.subr.mxu0 0.0
        %776 = vmatpush1.msra.mxu0 0.0
        %777 = vmatprep.subr.mxu0 0.0
        %778 = vmatpush1.msra.mxu0 0.0
        %779 = vmatprep.subr.mxu0 0.0
        %780 = vmatpush1.msra.mxu0 0.0
        %781 = vmatprep.subr.mxu0 0.0
        %782 = vmatpush1.msra.mxu0 0.0
        %783 = vmatprep.subr.mxu0 0.0
        %784 = vmatpush1.msra.mxu0 0.0
        %785 = vmatprep.subr.mxu0 0.0
        %786 = vmatpush1.msra.mxu0 0.0
        %787 = vmatprep.subr.mxu0 0.0
        %788 = vmatpush1.msra.mxu0 0.0
        %789 = vmatprep.subr.mxu0 0.0
        %790 = vmatpush1.msra.mxu0 0.0
        %791 = vmatprep.mubr.f32.mxu0 0.0
        %792 = vmatmul.mubr.f32.gmra.mrb[0].mxu0 %v716
        %v793 = vpop.f32.mrb[0].mxu0
        %v794 = vadd.f32 %v703, %v793
        %v795 = vpop.f32.mrb[0].mxu0
        %v796 = vadd.f32 %v704, %v795
        %797 = vmatprep.mubr.f32.mxu0 0.0
        %798 = vmatmul.mubr.f32.gmra.mrb[0].mxu0 %v719
        %v799 = vpop.f32.mrb[0].mxu0
        %v800 = vadd.f32 %v706, %v799
        %v801 = vpop.f32.mrb[0].mxu0
        %v802 = vadd.f32 %v707, %v801
        %803 = vmatprep.mubr.f32.mxu0 0.0
        %804 = vmatmul.mubr.f32.gmra.mrb[0].mxu0 %v722
        %v805 = vpop.f32.mrb[0].mxu0
        %v806 = vadd.f32 %v709, %v805
        %v807 = vpop.f32.mrb[0].mxu0
        %v808 = vadd.f32 %v710, %v807
        %809 = vmatprep.mubr.f32.mxu0 0.0
        %810 = vmatmul.mubr.f32.gmra.mrb[0].mxu0 %v725
        %v811 = vpop.f32.mrb[0].mxu0
        %v812 = vadd.f32 %v712, %v811
        %v813 = vpop.f32.mrb[0].mxu0
        %v814 = vadd.f32 %v713, %v813
        %815 = vdwg.mxu0
        %816 = vmatprep.subr.mxu0 0.0
        %817 = vmatpush1.msra.mxu0 %v695
        %818 = vmatprep.subr.mxu0 0.0
        %819 = vmatpush1.msra.mxu0 %v698
        %820 = vmatprep.subr.mxu0 0.0
        %821 = vmatpush1.msra.mxu0 0.0
        %822 = vmatprep.subr.mxu0 0.0
        %823 = vmatpush1.msra.mxu0 0.0
        %824 = vmatprep.subr.mxu0 0.0
        %825 = vmatpush1.msra.mxu0 0.0
        %826 = vmatprep.subr.mxu0 0.0
        %827 = vmatpush1.msra.mxu0 0.0
        %828 = vmatprep.subr.mxu0 0.0
        %829 = vmatpush1.msra.mxu0 0.0
        %830 = vmatprep.subr.mxu0 0.0
        %831 = vmatpush1.msra.mxu0 0.0
        %832 = vmatprep.subr.mxu0 0.0
        %833 = vmatpush1.msra.mxu0 0.0
        %834 = vmatprep.subr.mxu0 0.0
        %835 = vmatpush1.msra.mxu0 0.0
        %836 = vmatprep.subr.mxu0 0.0
        %837 = vmatpush1.msra.mxu0 0.0
        %838 = vmatprep.subr.mxu0 0.0
        %839 = vmatpush1.msra.mxu0 0.0
        %840 = vmatprep.subr.mxu0 0.0
        %841 = vmatpush1.msra.mxu0 0.0
        %842 = vmatprep.subr.mxu0 0.0
        %843 = vmatpush1.msra.mxu0 0.0
        %844 = vmatprep.subr.mxu0 0.0
        %845 = vmatpush1.msra.mxu0 0.0
        %846 = vmatprep.subr.mxu0 0.0
        %847 = vmatpush1.msra.mxu0 0.0
        %848 = vmatprep.subr.mxu0 0.0
        %849 = vmatpush1.msra.mxu0 0.0
        %850 = vmatprep.subr.mxu0 0.0
        %851 = vmatpush1.msra.mxu0 0.0
        %852 = vmatprep.subr.mxu0 0.0
        %853 = vmatpush1.msra.mxu0 0.0
        %854 = vmatprep.subr.mxu0 0.0
        %855 = vmatpush1.msra.mxu0 0.0
        %856 = vmatprep.subr.mxu0 0.0
        %857 = vmatpush1.msra.mxu0 0.0
        %858 = vmatprep.subr.mxu0 0.0
        %859 = vmatpush1.msra.mxu0 0.0
        %860 = vmatprep.subr.mxu0 0.0
        %861 = vmatpush1.msra.mxu0 0.0
        %862 = vmatprep.subr.mxu0 0.0
        %863 = vmatpush1.msra.mxu0 0.0
        %864 = vmatprep.subr.mxu0 0.0
        %865 = vmatpush1.msra.mxu0 0.0
        %866 = vmatprep.subr.mxu0 0.0
        %867 = vmatpush1.msra.mxu0 0.0
        %868 = vmatprep.subr.mxu0 0.0
        %869 = vmatpush1.msra.mxu0 0.0
        %870 = vmatprep.subr.mxu0 0.0
        %871 = vmatpush1.msra.mxu0 0.0
        %872 = vmatprep.subr.mxu0 0.0
        %873 = vmatpush1.msra.mxu0 0.0
        %874 = vmatprep.subr.mxu0 0.0
        %875 = vmatpush1.msra.mxu0 0.0
        %876 = vmatprep.subr.mxu0 0.0
        %877 = vmatpush1.msra.mxu0 0.0
        %878 = vmatprep.subr.mxu0 0.0
        %879 = vmatpush1.msra.mxu0 0.0
        %880 = vmatprep.mubr.f32.mxu0 0.0
        %881 = vmatmul.mubr.f32.gmra.mrb[0].mxu0 %v716
        %v882 = vpop.f32.mrb[0].mxu0
        %v883 = vadd.f32 %v705, %v882
        %v884 = vpop.f32.mrb[0].mxu0
        %885 = vmatprep.mubr.f32.mxu0 0.0
        %886 = vmatmul.mubr.f32.gmra.mrb[0].mxu0 %v719
        %v887 = vpop.f32.mrb[0].mxu0
        %v888 = vadd.f32 %v708, %v887
        %v889 = vpop.f32.mrb[0].mxu0
        %890 = vmatprep.mubr.f32.mxu0 0.0
        %891 = vmatmul.mubr.f32.gmra.mrb[0].mxu0 %v722
        %v892 = vpop.f32.mrb[0].mxu0
        %v893 = vadd.f32 %v711, %v892
        %v894 = vpop.f32.mrb[0].mxu0
        %895 = vmatprep.mubr.f32.mxu0 0.0
        %896 = vmatmul.mubr.f32.gmra.mrb[0].mxu0 %v725
        %v897 = vpop.f32.mrb[0].mxu0
        %v898 = vadd.f32 %v714, %v897
        %v899 = vpop.f32.mrb[0].mxu0
        %900 = vdwg.mxu0
        %v901 = vadd.f32 %v317, %v794
        %v902 = vadd.f32 %v318, %v796
        %v903 = vadd.f32 %v319, %v883
        %v904 = vadd.f32 %v320, %v800
        %v905 = vadd.f32 %v321, %v802
        %v906 = vadd.f32 %v322, %v888
        %v907 = vadd.f32 %v323, %v806
        %v908 = vadd.f32 %v324, %v808
        %v909 = vadd.f32 %v325, %v893
        %v910 = vadd.f32 %v326, %v812
        %v911 = vadd.f32 %v327, %v814
        %v912 = vadd.f32 %v328, %v898
        %913 = vst [vmem:[%s314] sm:$0xff] %v901
        %914 = vst [vmem:[%s314 + $0x8] sm:$0xff] %v902
        %915 = vst [vmem:[%s314 + $0x10] sm:$0xff] %v903
        %916 = vst [vmem:[%s314 + $0x18] sm:$0xff] %v904
        %917 = vst [vmem:[%s314 + $0x20] sm:$0xff] %v905
        %918 = vst [vmem:[%s314 + $0x28] sm:$0xff] %v906
        %919 = vst [vmem:[%s314 + $0x30] sm:$0xff] %v907
        %920 = vst [vmem:[%s314 + $0x38] sm:$0xff] %v908
        %921 = vst [vmem:[%s314 + $0x40] sm:$0xff] %v909
        %922 = vst [vmem:[%s314 + $0x48] sm:$0xff] %v910
        %923 = vst [vmem:[%s314 + $0x50] sm:$0xff] %v911
        %924 = vst [vmem:[%s314 + $0x58] sm:$0xff] %v912
        %s925 = sand.u32 %s178, 1
        %s926 = sand.u32 %s178, 1
        %s927 = smul.addr %s926, 96
        %s928 = scalar_lea.vmem [#allocation3], %s927
        // Predicated region
        $region72: #{attention_forward.1} parent=66 // pred_check
          %p929 = pneg %p188
        $region73: #{attention_forward.1} parent=66 // pred_check_branch
          %931 = sbr.rel (%p929) target = $region75
        $region74: #{attention_forward.1} parent=66 // pred_region
          %s932 = smul.u32 3, %s18
          %s933 = smul.addr %s932, 8
          %s934 = scalar_lea.vmem %s7, %s933
          // Predicated region
          $region76: #{attention_forward.1} parent=74 // pred_check
            _
          $region77: #{attention_forward.1} parent=74 // pred_check_branch
            %936 = sbr.rel (0) target = $region79
          $region78: #{attention_forward.1} parent=74 // pred_region
            // Predicated region
            $region80: #{attention_forward.1} parent=78 // pred_check
              _
            $region81: #{attention_forward.1} parent=78 // pred_check_branch
              %938 = sbr.rel (0) target = $region83
            $region82: #{attention_forward.1} parent=78 // pred_region
              loop: start=0, step=1, limit=1
              $region84: #{attention_forward.1} parent=82 // loop_pre_header
                _
              $region85: #{attention_forward.1} parent=82 // loop_header
                %s940 = sphi 0, %s944
                %p941 = scmp.ge.s32.totalorder %s940, 1
                %s945 = sphi %s928, %s928
                %s946 = sphi %s934, %s934
              $region86: #{attention_forward.1} parent=82 // loop_header_branch
                %943 = sbr.rel (%p941) target = $region90
              $region87: #{attention_forward.1} parent=82 // loop_body
                %v947 = vld [vmem:[%s945] sm:$0xff]
                %948 = vst [vmem:[%s946] sm:$0xff] %v947
                %v949 = vld [vmem:[%s945 + $0x8] sm:$0xff]
                %950 = vst [vmem:[%s946 + $0x8] sm:$0xff] %v949
                %v951 = vld [vmem:[%s945 + $0x10] sm:$0xff]
                %952 = vst [vmem:[%s946 + $0x10] sm:$0xff] %v951
                %v953 = vld [vmem:[%s945 + $0x18] sm:$0xff]
                %954 = vst [vmem:[%s946 + $0x30] sm:$0xff] %v953
                %v955 = vld [vmem:[%s945 + $0x20] sm:$0xff]
                %956 = vst [vmem:[%s946 + $0x38] sm:$0xff] %v955
                %v957 = vld [vmem:[%s945 + $0x28] sm:$0xff]
                %958 = vst [vmem:[%s946 + $0x40] sm:$0xff] %v957
                %v959 = vld [vmem:[%s945 + $0x30] sm:$0xff]
                %960 = vst [vmem:[%s946 + $0x60] sm:$0xff] %v959
                %v961 = vld [vmem:[%s945 + $0x38] sm:$0xff]
                %962 = vst [vmem:[%s946 + $0x68] sm:$0xff] %v961
                %v963 = vld [vmem:[%s945 + $0x40] sm:$0xff]
                %964 = vst [vmem:[%s946 + $0x70] sm:$0xff] %v963
                %v965 = vld [vmem:[%s945 + $0x48] sm:$0xff]
                %966 = vst [vmem:[%s946 + $0x90] sm:$0xff] %v965
                %v967 = vld [vmem:[%s945 + $0x50] sm:$0xff]
                %968 = vst [vmem:[%s946 + $0x98] sm:$0xff] %v967
                %v969 = vld [vmem:[%s945 + $0x58] sm:$0xff]
                %970 = vst [vmem:[%s946 + $0xa0] sm:$0xff] %v969
              $region88: #{attention_forward.1} parent=82 // loop_footer
                %s944 = sadd.s32 1, %s940
              $region89: #{attention_forward.1} parent=82 // loop_footer_branch
                %939 = sbr.rel target = $region85
              $region90: #{attention_forward.1} parent=82 // loop_exit
                _
            $region83: #{attention_forward.1} parent=78 // pred_fallthru
              _
            // Predicated region
            $region91: #{attention_forward.1} parent=78 // pred_check
              _
            $region92: #{attention_forward.1} parent=78 // pred_check_branch
              %972 = sbr.rel target = $region94
            $region93: #{attention_forward.1} parent=78 // pred_region
              _
            $region94: #{attention_forward.1} parent=78 // pred_fallthru
              _
          $region79: #{attention_forward.1} parent=74 // pred_fallthru
            _
          %973 = vnop
        $region75: #{attention_forward.1} parent=66 // pred_fallthru
          _
      $region67: #{attention_forward.1} parent=5 // pred_fallthru
        _
      %p974 = scmp.le.s32.totalorder 2, %s13
      // Predicated region
      $region95: #{attention_forward.1} parent=5 // pred_check
        %p975 = pneg %p974
      $region96: #{attention_forward.1} parent=5 // pred_check_branch
        %977 = sbr.rel (%p975) target = $region98
      $region97: #{attention_forward.1} parent=5 // pred_region
        %s978 = ssub.s32 %s13, 2
        // Predicated region
        $region99: #{attention_forward.1} parent=97 // pred_check
          %p979 = pneg %p194
        $region100: #{attention_forward.1} parent=97 // pred_check_branch
          %981 = sbr.rel (%p979) target = $region102
        $region101: #{attention_forward.1} parent=97 // pred_region
          %s982 = sand.u32 %s179, 1
          %s983 = sand.u32 %s179, 1
          %s984 = smul.addr %s983, 96
          %s985 = scalar_lea.vmem [#allocation3], %s984
        $region102: #{attention_forward.1} parent=97 // pred_fallthru
          _
      $region98: #{attention_forward.1} parent=5 // pred_fallthru
        _
    $region6: #{attention_forward.1} parent=1 // loop_footer
      %s17 = sadd.s32 1, %s13
    $region7: #{attention_forward.1} parent=1 // loop_footer_branch
      %12 = sbr.rel target = $region3
    $region8: #{attention_forward.1} parent=1 // loop_exit
      _

// kernel: reverse.1
$region0: #{reverse.1}
  #allocation0 [shape = 's32[1]{0}', space=sflag, size = 0x4, scoped, tag = 'scoped memory for reverse.1']
  %s0 = inlined_call_operand.vmem [shape: f32[2,32,16,7], index: 0, kind: input, shape index: {}]
  %s1 = inlined_call_operand.vmem [shape: f32[2,32,16,7], index: 1, kind: output, shape index: {}]
  %s2 = scalar_lea.vmem %s0, 96
  %v3 = vld [vmem:[%s2] sm:$0xff]
  %4 = vst [vmem:[%s1] sm:$0xff] %v3
  %s5 = scalar_lea.vmem %s0, 208
  %v6 = vld [vmem:[%s5] sm:$0xff]
  %s7 = scalar_lea.vmem %s1, 112
  %8 = vst [vmem:[%s7] sm:$0xff] %v6
  %s9 = scalar_lea.vmem %s0, 80
  %v10 = vld [vmem:[%s9] sm:$0xff]
  %s11 = scalar_lea.vmem %s1, 16
  %12 = vst [vmem:[%s11] sm:$0xff] %v10
  %s13 = scalar_lea.vmem %s0, 192
  %v14 = vld [vmem:[%s13] sm:$0xff]
  %s15 = scalar_lea.vmem %s1, 128
  %16 = vst [vmem:[%s15] sm:$0xff] %v14
  %s17 = scalar_lea.vmem %s0, 64
  %v18 = vld [vmem:[%s17] sm:$0xff]
  %s19 = scalar_lea.vmem %s1, 32
  %20 = vst [vmem:[%s19] sm:$0xff] %v18
  %s21 = scalar_lea.vmem %s0, 176
  %v22 = vld [vmem:[%s21] sm:$0xff]
  %s23 = scalar_lea.vmem %s1, 144
  %24 = vst [vmem:[%s23] sm:$0xff] %v22
  %s25 = scalar_lea.vmem %s0, 48
  %v26 = vld [vmem:[%s25] sm:$0xff]
  %s27 = scalar_lea.vmem %s1, 48
  %28 = vst [vmem:[%s27] sm:$0xff] %v26
  %s29 = scalar_lea.vmem %s0, 160
  %v30 = vld [vmem:[%s29] sm:$0xff]
  %s31 = scalar_lea.vmem %s1, 160
  %32 = vst [vmem:[%s31] sm:$0xff] %v30
  %s33 = scalar_lea.vmem %s0, 32
  %v34 = vld [vmem:[%s33] sm:$0xff]
  %s35 = scalar_lea.vmem %s1, 64
  %36 = vst [vmem:[%s35] sm:$0xff] %v34
  %s37 = scalar_lea.vmem %s0, 144
  %v38 = vld [vmem:[%s37] sm:$0xff]
  %s39 = scalar_lea.vmem %s1, 176
  %40 = vst [vmem:[%s39] sm:$0xff] %v38
  %s41 = scalar_lea.vmem %s0, 16
  %v42 = vld [vmem:[%s41] sm:$0xff]
  %s43 = scalar_lea.vmem %s1, 80
  %44 = vst [vmem:[%s43] sm:$0xff] %v42
  %s45 = scalar_lea.vmem %s0, 128
  %v46 = vld [vmem:[%s45] sm:$0xff]
  %s47 = scalar_lea.vmem %s1, 192
  %48 = vst [vmem:[%s47] sm:$0xff] %v46
  %v49 = vld [vmem:[%s0] sm:$0xff]
  %s50 = scalar_lea.vmem %s1, 96
  %51 = vst [vmem:[%s50] sm:$0xff] %v49
  %s52 = scalar_lea.vmem %s0, 112
  %v53 = vld [vmem:[%s52] sm:$0xff]
  %s54 = scalar_lea.vmem %s1, 208
  %55 = vst [vmem:[%s54] sm:$0xff] %v53
  %s56 = scalar_lea.vmem %s0, 104
  %v57 = vld [vmem:[%s56] sm:$0xff]
  %s58 = scalar_lea.vmem %s1, 8
  %59 = vst [vmem:[%s58] sm:$0xff] %v57
  %s60 = scalar_lea.vmem %s0, 216
  %v61 = vld [vmem:[%s60] sm:$0xff]
  %s62 = scalar_lea.vmem %s1, 120
  %63 = vst [vmem:[%s62] sm:$0xff] %v61
  %s64 = scalar_lea.vmem %s0, 88
  %v65 = vld [vmem:[%s64] sm:$0xff]
  %s66 = scalar_lea.vmem %s1, 24
  %67 = vst [vmem:[%s66] sm:$0xff] %v65
  %s68 = scalar_lea.vmem %s0, 200
  %v69 = vld [vmem:[%s68] sm:$0xff]
  %s70 = scalar_lea.vmem %s1, 136
  %71 = vst [vmem:[%s70] sm:$0xff] %v69
  %s72 = scalar_lea.vmem %s0, 72
  %v73 = vld [vmem:[%s72] sm:$0xff]
  %s74 = scalar_lea.vmem %s1, 40
  %75 = vst [vmem:[%s74] sm:$0xff] %v73
  %s76 = scalar_lea.vmem %s0, 184
  %v77 = vld [vmem:[%s76] sm:$0xff]
  %s78 = scalar_lea.vmem %s1, 152
  %79 = vst [vmem:[%s78] sm:$0xff] %v77
  %s80 = scalar_lea.vmem %s0, 56
  %v81 = vld [vmem:[%s80] sm:$0xff]
  %s82 = scalar_lea.vmem %s1, 56
  %83 = vst [vmem:[%s82] sm:$0xff] %v81
  %s84 = scalar_lea.vmem %s0, 168
  %v85 = vld [vmem:[%s84] sm:$0xff]
  %s86 = scalar_lea.vmem %s1, 168
  %87 = vst [vmem:[%s86] sm:$0xff] %v85
  %s88 = scalar_lea.vmem %s0, 40
  %v89 = vld [vmem:[%s88] sm:$0xff]
  %s90 = scalar_lea.vmem %s1, 72
  %91 = vst [vmem:[%s90] sm:$0xff] %v89
  %s92 = scalar_lea.vmem %s0, 152
  %v93 = vld [vmem:[%s92] sm:$0xff]
  %s94 = scalar_lea.vmem %s1, 184
  %95 = vst [vmem:[%s94] sm:$0xff] %v93
  %s96 = scalar_lea.vmem %s0, 24
  %v97 = vld [vmem:[%s96] sm:$0xff]
  %s98 = scalar_lea.vmem %s1, 88
  %99 = vst [vmem:[%s98] sm:$0xff] %v97
  %s100 = scalar_lea.vmem %s0, 136
  %v101 = vld [vmem:[%s100] sm:$0xff]
  %s102 = scalar_lea.vmem %s1, 200
  %103 = vst [vmem:[%s102] sm:$0xff] %v101
  %s104 = scalar_lea.vmem %s0, 8
  %v105 = vld [vmem:[%s104] sm:$0xff]
  %s106 = scalar_lea.vmem %s1, 104
  %107 = vst [vmem:[%s106] sm:$0xff] %v105
  %s108 = scalar_lea.vmem %s0, 120
  %v109 = vld [vmem:[%s108] sm:$0xff]
  %s110 = scalar_lea.vmem %s1, 216
  %111 = vst [vmem:[%s110] sm:$0xff] %v109

</llo_original>
